<compile_context>
chip_gen: v6e
topology: v6e:2x2x1
jax: 0.10.0
libtpu: 0.0.40
codegen_flags: <defaults>
</compile_context>

<pallas_src>
import jax
import jax.numpy as jnp
from jax.experimental import pallas as pl
from jax.experimental.pallas import tpu as pltpu

LANE = 128
SUBLANE = 8


def _round_up(n, m):
    return ((n + m - 1) // m) * m


def decoder_kernel(x_ref,
                   w1_ref, b1_ref,
                   w2_ref, b2_ref,
                   w3_ref, b3_ref,
                   w4_ref, b4_ref,
                   o_ref):
    # Fused MLP hot path: 4 MXU matmuls + VPU bias/ReLU on the current row tile.
    h = jnp.dot(x_ref[...], w1_ref[...], preferred_element_type=jnp.float32) + b1_ref[...]
    h = jnp.maximum(h, 0.0)
    h = jnp.dot(h, w2_ref[...], preferred_element_type=jnp.float32) + b2_ref[...]
    h = jnp.maximum(h, 0.0)
    h = jnp.dot(h, w3_ref[...], preferred_element_type=jnp.float32) + b3_ref[...]
    h = jnp.maximum(h, 0.0)
    o = jnp.dot(h, w4_ref[...], preferred_element_type=jnp.float32) + b4_ref[...]
    # Lane-dense store: o_ref is (tm, O_pad) with O_pad a multiple of 128.
    o_ref[...] = o.astype(o_ref.dtype)


def decoder_forward(x, params, *, tm=None):
    """x: [N, H] node features. params: w1..w4 ([in,out]) and b1..b4 ([1,out])."""
    N, H = x.shape
    O = params["w4"].shape[1]

    # --- Lane-dense output: pad the final projection to a multiple of 128 lanes.
    O_pad = _round_up(max(O, LANE), LANE)
    w4, b4 = params["w4"], params["b4"]
    if O_pad != O:
        w4 = jnp.pad(w4, ((0, 0), (0, O_pad - O)))
        b4 = jnp.pad(b4, ((0, 0), (0, O_pad - O)))

    # --- Row tiling: biggest tile that keeps live fp32 intermediates in vregs.
    if tm is None:
        tm = min(512, _round_up(N, SUBLANE))
    tm = _round_up(tm, SUBLANE)
    N_pad = _round_up(N, tm)
    if N_pad != N:
        x = jnp.pad(x, ((0, N_pad - N), (0, 0)))

    grid = (N_pad // tm,)

    def full(shape):
        # Grid-invariant operand (weights / biases): same block every step.
        return pl.BlockSpec(shape, lambda i: (0, 0))

    itemsize = jnp.dtype(x.dtype).itemsize
    flops = 2 * N_pad * (3 * H * H + H * O_pad)
    bytes_accessed = itemsize * (
        N_pad * H                      # x
        + 3 * (H * H + H)              # layers 1-3 weights + biases
        + H * O_pad + O_pad            # layer 4 (padded) weight + bias
        + N_pad * O_pad                # output
    )

    out = pl.pallas_call(
        decoder_kernel,
        out_shape=jax.ShapeDtypeStruct((N_pad, O_pad), x.dtype),
        grid_spec=pl.GridSpec(
            grid=grid,
            in_specs=[
                pl.BlockSpec((tm, H), lambda i: (i, 0)),   # x row tile
                full((H, H)), full((1, H)),                # layer 1
                full((H, H)), full((1, H)),                # layer 2
                full((H, H)), full((1, H)),                # layer 3
                full((H, O_pad)), full((1, O_pad)),        # layer 4 (padded output proj)
            ],
            out_specs=pl.BlockSpec((tm, O_pad), lambda i: (i, 0)),
        ),
        compiler_params=pltpu.CompilerParams(
            dimension_semantics=("parallel",),
            vmem_limit_bytes=32 * 1024 * 1024,
        ),
        cost_estimate=pl.CostEstimate(
            flops=flops, transcendentals=0, bytes_accessed=bytes_accessed),
    )(x,
      params["w1"], params["b1"],
      params["w2"], params["b2"],
      params["w3"], params["b3"],
      w4, b4)

    # Slice off row padding and output-lane padding.
    return out[:N, :O]


def init_params(key, hidden_size, output_size):
    """Deterministic init mimicking torch.nn.Linear default (U(-1/sqrt(in), 1/sqrt(in)))."""
    dims = [(hidden_size, hidden_size),
            (hidden_size, hidden_size),
            (hidden_size, hidden_size),
            (hidden_size, output_size)]
    params = {}
    for idx, (fan_in, fan_out) in enumerate(dims, start=1):
        key, kw, kb = jax.random.split(key, 3)
        bound = 1.0 / jnp.sqrt(float(fan_in))
        params[f"w{idx}"] = jax.random.uniform(
            kw, (fan_in, fan_out), jnp.float32, minval=-bound, maxval=bound)
        params[f"b{idx}"] = jax.random.uniform(
            kb, (1, fan_out), jnp.float32, minval=-bound, maxval=bound)
    return params


def decoder_reference(x, params):
    h = jnp.maximum(x @ params["w1"] + params["b1"], 0.0)
    h = jnp.maximum(h @ params["w2"] + params["b2"], 0.0)
    h = jnp.maximum(h @ params["w3"] + params["b3"], 0.0)
    return h @ params["w4"] + params["b4"]


if __name__ == "__main__":
    # Shapes consistent with Decoder(hidden_size=128, output_size=2); graph.x = [N, hidden].
    N, HIDDEN, OUT = 64, 128, 2

    key = jax.random.PRNGKey(0)
    key, kx = jax.random.split(key)
    x = jax.random.normal(kx, (N, HIDDEN), dtype=jnp.float32)
    params = init_params(key, HIDDEN, OUT)

    out = decoder_forward(x, params)
    out = jax.block_until_ready(out)

    ref = decoder_reference(x, params)
    assert out.shape == (N, OUT)
    assert jnp.allclose(out, ref, atol=1e-4, rtol=1e-4)

    # Also exercise a ragged, multi-tile case (grid > 1, padded rows).
    N2 = 1000
    key, kx2 = jax.random.split(key)
    x2 = jax.random.normal(kx2, (N2, HIDDEN), dtype=jnp.float32)
    out2 = jax.block_until_ready(decoder_forward(x2, params, tm=256))
    ref2 = decoder_reference(x2, params)
    assert out2.shape == (N2, OUT)
    assert jnp.allclose(out2, ref2, atol=1e-4, rtol=1e-4)

    print("KERNEL_OK")
</pallas_src>

<mosaic_0001>
module attributes {stable_mosaic.version = 11 : i64} {
  func.func @decoder_kernel(%arg0: i32, %arg1: memref<64x128xf32, #tpu.memory_space<vmem>>, %arg2: memref<128x128xf32, #tpu.memory_space<vmem>>, %arg3: memref<1x128xf32, #tpu.memory_space<vmem>>, %arg4: memref<128x128xf32, #tpu.memory_space<vmem>>, %arg5: memref<1x128xf32, #tpu.memory_space<vmem>>, %arg6: memref<128x128xf32, #tpu.memory_space<vmem>>, %arg7: memref<1x128xf32, #tpu.memory_space<vmem>>, %arg8: memref<128x128xf32, #tpu.memory_space<vmem>>, %arg9: memref<1x128xf32, #tpu.memory_space<vmem>>, %arg10: memref<64x128xf32, #tpu.memory_space<vmem>>) attributes {dimension_semantics = [#tpu.dimension_semantics<parallel>], iteration_bounds = array<i64: 1>, scalar_prefetch = 0 : i64, scratch_operands = 0 : i64, tpu.core_type = #tpu.core_type<tc>, window_params = [{transform_indices = @transform_0, window_bounds = array<i64: 64, 128>}, {pipeline_mode = #tpu.pipeline_mode<synchronous>, transform_indices = @transform_1, window_bounds = array<i64: 128, 128>}, {pipeline_mode = #tpu.pipeline_mode<synchronous>, transform_indices = @transform_2, window_bounds = array<i64: 1, 128>}, {pipeline_mode = #tpu.pipeline_mode<synchronous>, transform_indices = @transform_3, window_bounds = array<i64: 128, 128>}, {pipeline_mode = #tpu.pipeline_mode<synchronous>, transform_indices = @transform_4, window_bounds = array<i64: 1, 128>}, {pipeline_mode = #tpu.pipeline_mode<synchronous>, transform_indices = @transform_5, window_bounds = array<i64: 128, 128>}, {pipeline_mode = #tpu.pipeline_mode<synchronous>, transform_indices = @transform_6, window_bounds = array<i64: 1, 128>}, {pipeline_mode = #tpu.pipeline_mode<synchronous>, transform_indices = @transform_7, window_bounds = array<i64: 128, 128>}, {pipeline_mode = #tpu.pipeline_mode<synchronous>, transform_indices = @transform_8, window_bounds = array<i64: 1, 128>}, {transform_indices = @transform_9, window_bounds = array<i64: 64, 128>}]} {
    %c0 = arith.constant 0 : index
    %c0_0 = arith.constant 0 : index
    %0 = vector.load %arg1[%c0, %c0_0] : memref<64x128xf32, #tpu.memory_space<vmem>>, vector<64x128xf32>
    %c0_1 = arith.constant 0 : index
    %c0_2 = arith.constant 0 : index
    %1 = vector.load %arg2[%c0_1, %c0_2] : memref<128x128xf32, #tpu.memory_space<vmem>>, vector<128x128xf32>
    %cst = arith.constant dense<0.000000e+00> : vector<64x128xf32>
    %2 = tpu.matmul %0, %1, %cst {dimension_numbers = #tpu.dot_dimension_numbers<[1], [0], [0], [1], [0, 0, 1, 1], [], []>} : vector<64x128xf32>, vector<128x128xf32>, vector<64x128xf32> -> vector<64x128xf32>
    %c0_3 = arith.constant 0 : index
    %c0_4 = arith.constant 0 : index
    %3 = vector.load %arg3[%c0_3, %c0_4] : memref<1x128xf32, #tpu.memory_space<vmem>>, vector<1x128xf32>
    %4 = vector.broadcast %3 : vector<1x128xf32> to vector<64x128xf32>
    %5 = arith.addf %2, %4 : vector<64x128xf32>
    %cst_5 = arith.constant 0.000000e+00 : f32
    %6 = vector.broadcast %cst_5 : f32 to vector<64x128xf32>
    %7 = arith.maximumf %5, %6 : vector<64x128xf32>
    %c0_6 = arith.constant 0 : index
    %c0_7 = arith.constant 0 : index
    %8 = vector.load %arg4[%c0_6, %c0_7] : memref<128x128xf32, #tpu.memory_space<vmem>>, vector<128x128xf32>
    %cst_8 = arith.constant dense<0.000000e+00> : vector<64x128xf32>
    %9 = tpu.matmul %7, %8, %cst_8 {dimension_numbers = #tpu.dot_dimension_numbers<[1], [0], [0], [1], [0, 0, 1, 1], [], []>} : vector<64x128xf32>, vector<128x128xf32>, vector<64x128xf32> -> vector<64x128xf32>
    %c0_9 = arith.constant 0 : index
    %c0_10 = arith.constant 0 : index
    %10 = vector.load %arg5[%c0_9, %c0_10] : memref<1x128xf32, #tpu.memory_space<vmem>>, vector<1x128xf32>
    %11 = vector.broadcast %10 : vector<1x128xf32> to vector<64x128xf32>
    %12 = arith.addf %9, %11 : vector<64x128xf32>
    %cst_11 = arith.constant 0.000000e+00 : f32
    %13 = vector.broadcast %cst_11 : f32 to vector<64x128xf32>
    %14 = arith.maximumf %12, %13 : vector<64x128xf32>
    %c0_12 = arith.constant 0 : index
    %c0_13 = arith.constant 0 : index
    %15 = vector.load %arg6[%c0_12, %c0_13] : memref<128x128xf32, #tpu.memory_space<vmem>>, vector<128x128xf32>
    %cst_14 = arith.constant dense<0.000000e+00> : vector<64x128xf32>
    %16 = tpu.matmul %14, %15, %cst_14 {dimension_numbers = #tpu.dot_dimension_numbers<[1], [0], [0], [1], [0, 0, 1, 1], [], []>} : vector<64x128xf32>, vector<128x128xf32>, vector<64x128xf32> -> vector<64x128xf32>
    %c0_15 = arith.constant 0 : index
    %c0_16 = arith.constant 0 : index
    %17 = vector.load %arg7[%c0_15, %c0_16] : memref<1x128xf32, #tpu.memory_space<vmem>>, vector<1x128xf32>
    %18 = vector.broadcast %17 : vector<1x128xf32> to vector<64x128xf32>
    %19 = arith.addf %16, %18 : vector<64x128xf32>
    %cst_17 = arith.constant 0.000000e+00 : f32
    %20 = vector.broadcast %cst_17 : f32 to vector<64x128xf32>
    %21 = arith.maximumf %19, %20 : vector<64x128xf32>
    %c0_18 = arith.constant 0 : index
    %c0_19 = arith.constant 0 : index
    %22 = vector.load %arg8[%c0_18, %c0_19] : memref<128x128xf32, #tpu.memory_space<vmem>>, vector<128x128xf32>
    %cst_20 = arith.constant dense<0.000000e+00> : vector<64x128xf32>
    %23 = tpu.matmul %21, %22, %cst_20 {dimension_numbers = #tpu.dot_dimension_numbers<[1], [0], [0], [1], [0, 0, 1, 1], [], []>} : vector<64x128xf32>, vector<128x128xf32>, vector<64x128xf32> -> vector<64x128xf32>
    %c0_21 = arith.constant 0 : index
    %c0_22 = arith.constant 0 : index
    %24 = vector.load %arg9[%c0_21, %c0_22] : memref<1x128xf32, #tpu.memory_space<vmem>>, vector<1x128xf32>
    %25 = vector.broadcast %24 : vector<1x128xf32> to vector<64x128xf32>
    %26 = arith.addf %23, %25 : vector<64x128xf32>
    %c0_23 = arith.constant 0 : index
    %c0_24 = arith.constant 0 : index
    %27 = vector.load %arg10[%c0_23, %c0_24] : memref<64x128xf32, #tpu.memory_space<vmem>>, vector<64x128xf32>
    tpu.vector_store %arg10[%c0_23, %c0_24], %26 {strides = array<i32>} : memref<64x128xf32, #tpu.memory_space<vmem>>, vector<64x128xf32>,
    return
  }
  func.func @transform_0(%arg0: i32) -> (i32, i32) {
    %c0_i32 = arith.constant 0 : i32
    %c0_i32_0 = arith.constant 0 : i32
    return %arg0, %c0_i32 : i32, i32
  }
  func.func @transform_1(%arg0: i32) -> (i32, i32) {
    %c0_i32 = arith.constant 0 : i32
    %c0_i32_0 = arith.constant 0 : i32
    %c0_i32_1 = arith.constant 0 : i32
    return %c0_i32, %c0_i32_0 : i32, i32
  }
  func.func @transform_2(%arg0: i32) -> (i32, i32) {
    %c0_i32 = arith.constant 0 : i32
    %c0_i32_0 = arith.constant 0 : i32
    %c0_i32_1 = arith.constant 0 : i32
    return %c0_i32, %c0_i32_0 : i32, i32
  }
  func.func @transform_3(%arg0: i32) -> (i32, i32) {
    %c0_i32 = arith.constant 0 : i32
    %c0_i32_0 = arith.constant 0 : i32
    %c0_i32_1 = arith.constant 0 : i32
    return %c0_i32, %c0_i32_0 : i32, i32
  }
  func.func @transform_4(%arg0: i32) -> (i32, i32) {
    %c0_i32 = arith.constant 0 : i32
    %c0_i32_0 = arith.constant 0 : i32
    %c0_i32_1 = arith.constant 0 : i32
    return %c0_i32, %c0_i32_0 : i32, i32
  }
  func.func @transform_5(%arg0: i32) -> (i32, i32) {
    %c0_i32 = arith.constant 0 : i32
    %c0_i32_0 = arith.constant 0 : i32
    %c0_i32_1 = arith.constant 0 : i32
    return %c0_i32, %c0_i32_0 : i32, i32
  }
  func.func @transform_6(%arg0: i32) -> (i32, i32) {
    %c0_i32 = arith.constant 0 : i32
    %c0_i32_0 = arith.constant 0 : i32
    %c0_i32_1 = arith.constant 0 : i32
    return %c0_i32, %c0_i32_0 : i32, i32
  }
  func.func @transform_7(%arg0: i32) -> (i32, i32) {
    %c0_i32 = arith.constant 0 : i32
    %c0_i32_0 = arith.constant 0 : i32
    %c0_i32_1 = arith.constant 0 : i32
    return %c0_i32, %c0_i32_0 : i32, i32
  }
  func.func @transform_8(%arg0: i32) -> (i32, i32) {
    %c0_i32 = arith.constant 0 : i32
    %c0_i32_0 = arith.constant 0 : i32
    %c0_i32_1 = arith.constant 0 : i32
    return %c0_i32, %c0_i32_0 : i32, i32
  }
  func.func @transform_9(%arg0: i32) -> (i32, i32) {
    %c0_i32 = arith.constant 0 : i32
    %c0_i32_0 = arith.constant 0 : i32
    return %arg0, %c0_i32 : i32, i32
  }
}

</mosaic_0001>

<llo_original>
// kernel: tpu_custom_call.1
$region0: #{tpu_custom_call.1}
  #allocation0 [shape = 'u32[]', space=smem, size = 0x4, offset = 0x4, fixed_abs, tag = 'smem constant byte address 0x4 - core index']
  #allocation1 [shape = 'u32[144,128]{1,0:T(1,128)}', space=vmem, size = 0x12000, scoped, tag = 'internal scratch']
  %s0 = inlined_call_operand.hbm [shape: f32[64,128], index: 0, kind: input, shape index: {}]
  %s1 = inlined_call_operand.hbm [shape: f32[128,128], index: 1, kind: input, shape index: {}]
  %s2 = inlined_call_operand.vmem [shape: f32[1,128], index: 2, kind: input, shape index: {}]
  %s3 = inlined_call_operand.hbm [shape: f32[128,128], index: 3, kind: input, shape index: {}]
  %s4 = inlined_call_operand.vmem [shape: f32[1,128], index: 4, kind: input, shape index: {}]
  %s5 = inlined_call_operand.hbm [shape: f32[128,128], index: 5, kind: input, shape index: {}]
  %s6 = inlined_call_operand.vmem [shape: f32[1,128], index: 6, kind: input, shape index: {}]
  %s7 = inlined_call_operand.hbm [shape: f32[128,128], index: 7, kind: input, shape index: {}]
  %s8 = inlined_call_operand.vmem [shape: f32[1,128], index: 8, kind: input, shape index: {}]
  %s9 = inlined_call_operand.hbm [shape: f32[64,128], index: 9, kind: output, shape index: {}]
  %s10 = sld [smem:[#allocation0]]
  $region66: #{tpu_custom_call.1} parent=0
    _
  %s12 = ssub.s32 1, %s10
  %s13 = scalar_select 0, %s12, %s10
  $region1: #{tpu_custom_call.1} parent=0
    #allocation2 [shape = 'u8[32768]{0}', space=vmem, size = 0x8000, scoped, tag = 'input window, operand 0, single buffered']
    #allocation3 [shape = 's32[1]{0}', space=sflag, size = 0x4, scoped, tag = 'scoped memory for tpu_custom_call.1']
    #allocation4 [shape = 's32[1]{0}', space=sflag, size = 0x4, scoped, tag = 'scoped memory for tpu_custom_call.1']
    #allocation5 [shape = 'u8[65536]{0}', space=vmem, size = 0x10000, scoped, tag = 'input window, operand 1, single buffered']
    #allocation6 [shape = 's32[1]{0}', space=sflag, size = 0x4, scoped, tag = 'scoped memory for tpu_custom_call.1']
    #allocation7 [shape = 'u8[65536]{0}', space=vmem, size = 0x10000, scoped, tag = 'input window, operand 3, single buffered']
    #allocation8 [shape = 'u8[65536]{0}', space=vmem, size = 0x10000, scoped, tag = 'input window, operand 5, single buffered']
    #allocation9 [shape = 's32[1]{0}', space=sflag, size = 0x4, scoped, tag = 'scoped memory for tpu_custom_call.1']
    #allocation10 [shape = 'u8[65536]{0}', space=vmem, size = 0x10000, scoped, tag = 'input window, operand 7, single buffered']
    #allocation11 [shape = 'u8[32768]{0}', space=vmem, size = 0x8000, scoped, tag = 'output window, operand 0, single buffered']
    %14 = vsyncpa [#allocation3], 0
    %15 = vsyncpa [#allocation6], 0
    %16 = vsyncpa [#allocation9], 0
    %17 = vsyncpa [#allocation4], 0
    // Predicated region
    $region2: #{tpu_custom_call.1} parent=1 // pred_check
      _
    $region3: #{tpu_custom_call.1} parent=1 // pred_check_branch
      %19 = sbr.rel (0) target = $region5
    $region4: #{tpu_custom_call.1} parent=1 // pred_region
      %s21 = ssub.s32 1024, 1024
      %22 = vsyncadd [#allocation3], %s21
      %s23 = sshll.u32 [#allocation2], 4
      %s24 = int_to_ptr.vmem [resolvable:$true] %s23
      %29 = dma.hbm_to_vmem [thread:$0]  %s0, 1024, %s24, [#allocation3], 128, 128, 8
    $region5: #{tpu_custom_call.1} parent=1 // pred_fallthru
      _
    // Predicated region
    $region6: #{tpu_custom_call.1} parent=1 // pred_check
      _
    $region7: #{tpu_custom_call.1} parent=1 // pred_check_branch
      %31 = sbr.rel (0) target = $region9
    $region8: #{tpu_custom_call.1} parent=1 // pred_region
      %s33 = ssub.s32 2048, 2048
      %34 = vsyncadd [#allocation6], %s33
      %s35 = sshll.u32 [#allocation5], 4
      %s36 = int_to_ptr.vmem [resolvable:$true] %s35
      %41 = dma.hbm_to_vmem [thread:$0]  %s1, 2048, %s36, [#allocation6], 128, 128, 8
    $region9: #{tpu_custom_call.1} parent=1 // pred_fallthru
      _
    // Predicated region
    $region10: #{tpu_custom_call.1} parent=1 // pred_check
      _
    $region11: #{tpu_custom_call.1} parent=1 // pred_check_branch
      %43 = sbr.rel (0) target = $region13
    $region12: #{tpu_custom_call.1} parent=1 // pred_region
      _
    $region13: #{tpu_custom_call.1} parent=1 // pred_fallthru
      _
    // Predicated region
    $region14: #{tpu_custom_call.1} parent=1 // pred_check
      _
    $region15: #{tpu_custom_call.1} parent=1 // pred_check_branch
      %45 = sbr.rel (0) target = $region17
    $region16: #{tpu_custom_call.1} parent=1 // pred_region
      %s47 = ssub.s32 2048, 2048
      %48 = vsyncadd [#allocation6], %s47
      %s49 = sshll.u32 [#allocation7], 4
      %s50 = int_to_ptr.vmem [resolvable:$true] %s49
      %55 = dma.hbm_to_vmem [thread:$0]  %s3, 2048, %s50, [#allocation6], 128, 128, 8
    $region17: #{tpu_custom_call.1} parent=1 // pred_fallthru
      _
    // Predicated region
    $region18: #{tpu_custom_call.1} parent=1 // pred_check
      _
    $region19: #{tpu_custom_call.1} parent=1 // pred_check_branch
      %57 = sbr.rel (0) target = $region21
    $region20: #{tpu_custom_call.1} parent=1 // pred_region
      _
    $region21: #{tpu_custom_call.1} parent=1 // pred_fallthru
      _
    // Predicated region
    $region22: #{tpu_custom_call.1} parent=1 // pred_check
      _
    $region23: #{tpu_custom_call.1} parent=1 // pred_check_branch
      %59 = sbr.rel (0) target = $region25
    $region24: #{tpu_custom_call.1} parent=1 // pred_region
      %s61 = ssub.s32 2048, 2048
      %62 = vsyncadd [#allocation9], %s61
      %s63 = sshll.u32 [#allocation8], 4
      %s64 = int_to_ptr.vmem [resolvable:$true] %s63
      %69 = dma.hbm_to_vmem [thread:$0]  %s5, 2048, %s64, [#allocation9], 128, 128, 8
    $region25: #{tpu_custom_call.1} parent=1 // pred_fallthru
      _
    // Predicated region
    $region26: #{tpu_custom_call.1} parent=1 // pred_check
      _
    $region27: #{tpu_custom_call.1} parent=1 // pred_check_branch
      %71 = sbr.rel (0) target = $region29
    $region28: #{tpu_custom_call.1} parent=1 // pred_region
      _
    $region29: #{tpu_custom_call.1} parent=1 // pred_fallthru
      _
    // Predicated region
    $region30: #{tpu_custom_call.1} parent=1 // pred_check
      _
    $region31: #{tpu_custom_call.1} parent=1 // pred_check_branch
      %73 = sbr.rel (0) target = $region33
    $region32: #{tpu_custom_call.1} parent=1 // pred_region
      %s75 = ssub.s32 2048, 2048
      %76 = vsyncadd [#allocation9], %s75
      %s77 = sshll.u32 [#allocation10], 4
      %s78 = int_to_ptr.vmem [resolvable:$true] %s77
      %83 = dma.hbm_to_vmem [thread:$0]  %s7, 2048, %s78, [#allocation9], 128, 128, 8
    $region33: #{tpu_custom_call.1} parent=1 // pred_fallthru
      _
    // Predicated region
    $region34: #{tpu_custom_call.1} parent=1 // pred_check
      _
    $region35: #{tpu_custom_call.1} parent=1 // pred_check_branch
      %85 = sbr.rel (0) target = $region37
    $region36: #{tpu_custom_call.1} parent=1 // pred_region
      _
    $region37: #{tpu_custom_call.1} parent=1 // pred_fallthru
      _
    // Predicated region
    $region38: #{tpu_custom_call.1} parent=1 // pred_check
      _
    $region39: #{tpu_custom_call.1} parent=1 // pred_check_branch
      %87 = sbr.rel (0) target = $region41
    $region40: #{tpu_custom_call.1} parent=1 // pred_region
      %88 = dma.done [#allocation3], 1024
    $region41: #{tpu_custom_call.1} parent=1 // pred_fallthru
      _
    // Predicated region
    $region42: #{tpu_custom_call.1} parent=1 // pred_check
      _
    $region43: #{tpu_custom_call.1} parent=1 // pred_check_branch
      %90 = sbr.rel (0) target = $region45
    $region44: #{tpu_custom_call.1} parent=1 // pred_region
      %91 = dma.done [#allocation6], 2048
    $region45: #{tpu_custom_call.1} parent=1 // pred_fallthru
      _
    // Predicated region
    $region46: #{tpu_custom_call.1} parent=1 // pred_check
      _
    $region47: #{tpu_custom_call.1} parent=1 // pred_check_branch
      %93 = sbr.rel (0) target = $region49
    $region48: #{tpu_custom_call.1} parent=1 // pred_region
      %94 = dma.done [#allocation6], 2048
    $region49: #{tpu_custom_call.1} parent=1 // pred_fallthru
      _
    // Predicated region
    $region50: #{tpu_custom_call.1} parent=1 // pred_check
      _
    $region51: #{tpu_custom_call.1} parent=1 // pred_check_branch
      %96 = sbr.rel (0) target = $region53
    $region52: #{tpu_custom_call.1} parent=1 // pred_region
      %97 = dma.done [#allocation9], 2048
    $region53: #{tpu_custom_call.1} parent=1 // pred_fallthru
      _
    // Predicated region
    $region54: #{tpu_custom_call.1} parent=1 // pred_check
      _
    $region55: #{tpu_custom_call.1} parent=1 // pred_check_branch
      %99 = sbr.rel (0) target = $region57
    $region56: #{tpu_custom_call.1} parent=1 // pred_region
      %100 = dma.done [#allocation9], 2048
    $region57: #{tpu_custom_call.1} parent=1 // pred_fallthru
      _
    %v101 = vld [vmem:[#allocation2] sm:$0xff]
    %v102 = vld [vmem:[#allocation2 + $0x8] sm:$0xff]
    %v103 = vld [vmem:[#allocation2 + $0x10] sm:$0xff]
    %v104 = vld [vmem:[#allocation2 + $0x18] sm:$0xff]
    %v105 = vld [vmem:[#allocation2 + $0x20] sm:$0xff]
    %v106 = vld [vmem:[#allocation2 + $0x28] sm:$0xff]
    %v107 = vld [vmem:[#allocation2 + $0x30] sm:$0xff]
    %v108 = vld [vmem:[#allocation2 + $0x38] sm:$0xff]
    %v109 = vld [vmem:[#allocation5] sm:$0xff]
    %v110 = vld [vmem:[#allocation5 + $0x8] sm:$0xff]
    %v111 = vld [vmem:[#allocation5 + $0x10] sm:$0xff]
    %v112 = vld [vmem:[#allocation5 + $0x18] sm:$0xff]
    %v113 = vld [vmem:[#allocation5 + $0x20] sm:$0xff]
    %v114 = vld [vmem:[#allocation5 + $0x28] sm:$0xff]
    %v115 = vld [vmem:[#allocation5 + $0x30] sm:$0xff]
    %v116 = vld [vmem:[#allocation5 + $0x38] sm:$0xff]
    %v117 = vld [vmem:[#allocation5 + $0x40] sm:$0xff]
    %v118 = vld [vmem:[#allocation5 + $0x48] sm:$0xff]
    %v119 = vld [vmem:[#allocation5 + $0x50] sm:$0xff]
    %v120 = vld [vmem:[#allocation5 + $0x58] sm:$0xff]
    %v121 = vld [vmem:[#allocation5 + $0x60] sm:$0xff]
    %v122 = vld [vmem:[#allocation5 + $0x68] sm:$0xff]
    %v123 = vld [vmem:[#allocation5 + $0x70] sm:$0xff]
    %v124 = vld [vmem:[#allocation5 + $0x78] sm:$0xff]
    %v125 = vld [vmem:[%s2] sm:$0x1]
    %v127 = vlaneseq
    %v128 = vshrl.u32 %v127, 7
    %v129 = vsub.s32 0, %v128
    %v130 = vrot.slane %v125, %v129
    %132 = vmatprep.subr.mxu0 0.0
    %133 = vmatpush1.msra.mxu0 %v124
    %134 = vmatprep.subr.mxu0 0.0
    %135 = vmatpush1.msra.mxu0 %v123
    %136 = vmatprep.subr.mxu0 0.0
    %137 = vmatpush1.msra.mxu0 %v122
    %138 = vmatprep.subr.mxu0 0.0
    %139 = vmatpush1.msra.mxu0 %v121
    %140 = vmatprep.subr.mxu0 0.0
    %141 = vmatpush1.msra.mxu0 %v120
    %142 = vmatprep.subr.mxu0 0.0
    %143 = vmatpush1.msra.mxu0 %v119
    %144 = vmatprep.subr.mxu0 0.0
    %145 = vmatpush1.msra.mxu0 %v118
    %146 = vmatprep.subr.mxu0 0.0
    %147 = vmatpush1.msra.mxu0 %v117
    %148 = vmatprep.subr.mxu0 0.0
    %149 = vmatpush1.msra.mxu0 %v116
    %150 = vmatprep.subr.mxu0 0.0
    %151 = vmatpush1.msra.mxu0 %v115
    %152 = vmatprep.subr.mxu0 0.0
    %153 = vmatpush1.msra.mxu0 %v114
    %154 = vmatprep.subr.mxu0 0.0
    %155 = vmatpush1.msra.mxu0 %v113
    %156 = vmatprep.subr.mxu0 0.0
    %157 = vmatpush1.msra.mxu0 %v112
    %158 = vmatprep.subr.mxu0 0.0
    %159 = vmatpush1.msra.mxu0 %v111
    %160 = vmatprep.subr.mxu0 0.0
    %161 = vmatpush1.msra.mxu0 %v110
    %162 = vmatprep.subr.mxu0 0.0
    %163 = vmatpush1.msra.mxu0 %v109
    %164 = vmatprep.subr.mxu0 0.0
    %165 = vmatpush2.msra.mxu0 0.0
    %166 = vmatprep.subr.mxu0 0.0
    %167 = vmatpush2.msra.mxu0 0.0
    %168 = vmatprep.subr.mxu0 0.0
    %169 = vmatpush2.msra.mxu0 0.0
    %170 = vmatprep.subr.mxu0 0.0
    %171 = vmatpush2.msra.mxu0 0.0
    %172 = vmatprep.subr.mxu0 0.0
    %173 = vmatpush2.msra.mxu0 0.0
    %174 = vmatprep.subr.mxu0 0.0
    %175 = vmatpush2.msra.mxu0 0.0
    %176 = vmatprep.subr.mxu0 0.0
    %177 = vmatpush2.msra.mxu0 0.0
    %178 = vmatprep.subr.mxu0 0.0
    %179 = vmatpush2.msra.mxu0 0.0
    %180 = vmatprep.subr.mxu0 0.0
    %181 = vmatpush2.msra.mxu0 0.0
    %182 = vmatprep.subr.mxu0 0.0
    %183 = vmatpush2.msra.mxu0 0.0
    %184 = vmatprep.subr.mxu0 0.0
    %185 = vmatpush2.msra.mxu0 0.0
    %186 = vmatprep.subr.mxu0 0.0
    %187 = vmatpush2.msra.mxu0 0.0
    %188 = vmatprep.subr.mxu0 0.0
    %189 = vmatpush2.msra.mxu0 0.0
    %190 = vmatprep.subr.mxu0 0.0
    %191 = vmatpush2.msra.mxu0 0.0
    %192 = vmatprep.subr.mxu0 0.0
    %193 = vmatpush2.msra.mxu0 0.0
    %194 = vmatprep.subr.mxu0 0.0
    %195 = vmatpush2.msra.mxu0 0.0
    %196 = vmatprep.mubr.f32.mxu0 0.0
    %197 = vmatmul.mubr.f32.gmra.mxu0 %v101
    %v198 = vpop.f32.mrf.mxu0
    %v199 = vadd.f32 %v130, %v198
    %v200 = vpop.f32.mrf.mxu0
    %201 = vmatprep.mubr.f32.mxu0 0.0
    %202 = vmatmul.mubr.f32.gmra.mxu0 %v102
    %v203 = vpop.f32.mrf.mxu0
    %v204 = vadd.f32 %v130, %v203
    %v205 = vpop.f32.mrf.mxu0
    %206 = vmatprep.mubr.f32.mxu0 0.0
    %207 = vmatmul.mubr.f32.gmra.mxu0 %v103
    %v208 = vpop.f32.mrf.mxu0
    %v209 = vadd.f32 %v130, %v208
    %v210 = vpop.f32.mrf.mxu0
    %211 = vmatprep.mubr.f32.mxu0 0.0
    %212 = vmatmul.mubr.f32.gmra.mxu0 %v104
    %v213 = vpop.f32.mrf.mxu0
    %v214 = vadd.f32 %v130, %v213
    %v215 = vpop.f32.mrf.mxu0
    %216 = vmatprep.mubr.f32.mxu0 0.0
    %217 = vmatmul.mubr.f32.gmra.mxu0 %v105
    %v218 = vpop.f32.mrf.mxu0
    %v219 = vadd.f32 %v130, %v218
    %v220 = vpop.f32.mrf.mxu0
    %221 = vmatprep.mubr.f32.mxu0 0.0
    %222 = vmatmul.mubr.f32.gmra.mxu0 %v106
    %v223 = vpop.f32.mrf.mxu0
    %v224 = vadd.f32 %v130, %v223
    %v225 = vpop.f32.mrf.mxu0
    %226 = vmatprep.mubr.f32.mxu0 0.0
    %227 = vmatmul.mubr.f32.gmra.mxu0 %v107
    %v228 = vpop.f32.mrf.mxu0
    %v229 = vadd.f32 %v130, %v228
    %v230 = vpop.f32.mrf.mxu0
    %231 = vmatprep.mubr.f32.mxu0 0.0
    %232 = vmatmul.mubr.f32.gmra.mxu0 %v108
    %v233 = vpop.f32.mrf.mxu0
    %v234 = vadd.f32 %v130, %v233
    %v235 = vpop.f32.mrf.mxu0
    %236 = vdwg.mxu0
    %v237 = vmax.f32 %v199, 0.0
    %v238 = vmax.f32 %v204, 0.0
    %v239 = vmax.f32 %v209, 0.0
    %v240 = vmax.f32 %v214, 0.0
    %v241 = vmax.f32 %v219, 0.0
    %v242 = vmax.f32 %v224, 0.0
    %v243 = vmax.f32 %v229, 0.0
    %v244 = vmax.f32 %v234, 0.0
    %v245 = vld [vmem:[#allocation7] sm:$0xff]
    %v246 = vld [vmem:[#allocation7 + $0x8] sm:$0xff]
    %v247 = vld [vmem:[#allocation7 + $0x10] sm:$0xff]
    %v248 = vld [vmem:[#allocation7 + $0x18] sm:$0xff]
    %v249 = vld [vmem:[#allocation7 + $0x20] sm:$0xff]
    %v250 = vld [vmem:[#allocation7 + $0x28] sm:$0xff]
    %v251 = vld [vmem:[#allocation7 + $0x30] sm:$0xff]
    %v252 = vld [vmem:[#allocation7 + $0x38] sm:$0xff]
    %v253 = vld [vmem:[#allocation7 + $0x40] sm:$0xff]
    %v254 = vld [vmem:[#allocation7 + $0x48] sm:$0xff]
    %v255 = vld [vmem:[#allocation7 + $0x50] sm:$0xff]
    %v256 = vld [vmem:[#allocation7 + $0x58] sm:$0xff]
    %v257 = vld [vmem:[#allocation7 + $0x60] sm:$0xff]
    %v258 = vld [vmem:[#allocation7 + $0x68] sm:$0xff]
    %v259 = vld [vmem:[#allocation7 + $0x70] sm:$0xff]
    %v260 = vld [vmem:[#allocation7 + $0x78] sm:$0xff]
    %v261 = vld [vmem:[%s4] sm:$0x1]
    %v263 = vlaneseq
    %v264 = vshrl.u32 %v263, 7
    %v265 = vsub.s32 0, %v264
    %v266 = vrot.slane %v261, %v265
    %268 = vmatprep.subr.mxu0 0.0
    %269 = vmatpush1.msra.mxu0 %v260
    %270 = vmatprep.subr.mxu0 0.0
    %271 = vmatpush1.msra.mxu0 %v259
    %272 = vmatprep.subr.mxu0 0.0
    %273 = vmatpush1.msra.mxu0 %v258
    %274 = vmatprep.subr.mxu0 0.0
    %275 = vmatpush1.msra.mxu0 %v257
    %276 = vmatprep.subr.mxu0 0.0
    %277 = vmatpush1.msra.mxu0 %v256
    %278 = vmatprep.subr.mxu0 0.0
    %279 = vmatpush1.msra.mxu0 %v255
    %280 = vmatprep.subr.mxu0 0.0
    %281 = vmatpush1.msra.mxu0 %v254
    %282 = vmatprep.subr.mxu0 0.0
    %283 = vmatpush1.msra.mxu0 %v253
    %284 = vmatprep.subr.mxu0 0.0
    %285 = vmatpush1.msra.mxu0 %v252
    %286 = vmatprep.subr.mxu0 0.0
    %287 = vmatpush1.msra.mxu0 %v251
    %288 = vmatprep.subr.mxu0 0.0
    %289 = vmatpush1.msra.mxu0 %v250
    %290 = vmatprep.subr.mxu0 0.0
    %291 = vmatpush1.msra.mxu0 %v249
    %292 = vmatprep.subr.mxu0 0.0
    %293 = vmatpush1.msra.mxu0 %v248
    %294 = vmatprep.subr.mxu0 0.0
    %295 = vmatpush1.msra.mxu0 %v247
    %296 = vmatprep.subr.mxu0 0.0
    %297 = vmatpush1.msra.mxu0 %v246
    %298 = vmatprep.subr.mxu0 0.0
    %299 = vmatpush1.msra.mxu0 %v245
    %300 = vmatprep.subr.mxu0 0.0
    %301 = vmatpush2.msra.mxu0 0.0
    %302 = vmatprep.subr.mxu0 0.0
    %303 = vmatpush2.msra.mxu0 0.0
    %304 = vmatprep.subr.mxu0 0.0
    %305 = vmatpush2.msra.mxu0 0.0
    %306 = vmatprep.subr.mxu0 0.0
    %307 = vmatpush2.msra.mxu0 0.0
    %308 = vmatprep.subr.mxu0 0.0
    %309 = vmatpush2.msra.mxu0 0.0
    %310 = vmatprep.subr.mxu0 0.0
    %311 = vmatpush2.msra.mxu0 0.0
    %312 = vmatprep.subr.mxu0 0.0
    %313 = vmatpush2.msra.mxu0 0.0
    %314 = vmatprep.subr.mxu0 0.0
    %315 = vmatpush2.msra.mxu0 0.0
    %316 = vmatprep.subr.mxu0 0.0
    %317 = vmatpush2.msra.mxu0 0.0
    %318 = vmatprep.subr.mxu0 0.0
    %319 = vmatpush2.msra.mxu0 0.0
    %320 = vmatprep.subr.mxu0 0.0
    %321 = vmatpush2.msra.mxu0 0.0
    %322 = vmatprep.subr.mxu0 0.0
    %323 = vmatpush2.msra.mxu0 0.0
    %324 = vmatprep.subr.mxu0 0.0
    %325 = vmatpush2.msra.mxu0 0.0
    %326 = vmatprep.subr.mxu0 0.0
    %327 = vmatpush2.msra.mxu0 0.0
    %328 = vmatprep.subr.mxu0 0.0
    %329 = vmatpush2.msra.mxu0 0.0
    %330 = vmatprep.subr.mxu0 0.0
    %331 = vmatpush2.msra.mxu0 0.0
    %332 = vmatprep.mubr.f32.mxu0 0.0
    %333 = vmatmul.mubr.f32.gmra.mxu0 %v237
    %v334 = vpop.f32.mrf.mxu0
    %v335 = vadd.f32 %v266, %v334
    %v336 = vpop.f32.mrf.mxu0
    %337 = vmatprep.mubr.f32.mxu0 0.0
    %338 = vmatmul.mubr.f32.gmra.mxu0 %v238
    %v339 = vpop.f32.mrf.mxu0
    %v340 = vadd.f32 %v266, %v339
    %v341 = vpop.f32.mrf.mxu0
    %342 = vmatprep.mubr.f32.mxu0 0.0
    %343 = vmatmul.mubr.f32.gmra.mxu0 %v239
    %v344 = vpop.f32.mrf.mxu0
    %v345 = vadd.f32 %v266, %v344
    %v346 = vpop.f32.mrf.mxu0
    %347 = vmatprep.mubr.f32.mxu0 0.0
    %348 = vmatmul.mubr.f32.gmra.mxu0 %v240
    %v349 = vpop.f32.mrf.mxu0
    %v350 = vadd.f32 %v266, %v349
    %v351 = vpop.f32.mrf.mxu0
    %352 = vmatprep.mubr.f32.mxu0 0.0
    %353 = vmatmul.mubr.f32.gmra.mxu0 %v241
    %v354 = vpop.f32.mrf.mxu0
    %v355 = vadd.f32 %v266, %v354
    %v356 = vpop.f32.mrf.mxu0
    %357 = vmatprep.mubr.f32.mxu0 0.0
    %358 = vmatmul.mubr.f32.gmra.mxu0 %v242
    %v359 = vpop.f32.mrf.mxu0
    %v360 = vadd.f32 %v266, %v359
    %v361 = vpop.f32.mrf.mxu0
    %362 = vmatprep.mubr.f32.mxu0 0.0
    %363 = vmatmul.mubr.f32.gmra.mxu0 %v243
    %v364 = vpop.f32.mrf.mxu0
    %v365 = vadd.f32 %v266, %v364
    %v366 = vpop.f32.mrf.mxu0
    %367 = vmatprep.mubr.f32.mxu0 0.0
    %368 = vmatmul.mubr.f32.gmra.mxu0 %v244
    %v369 = vpop.f32.mrf.mxu0
    %v370 = vadd.f32 %v266, %v369
    %v371 = vpop.f32.mrf.mxu0
    %372 = vdwg.mxu0
    %v373 = vmax.f32 %v335, 0.0
    %v374 = vmax.f32 %v340, 0.0
    %v375 = vmax.f32 %v345, 0.0
    %v376 = vmax.f32 %v350, 0.0
    %v377 = vmax.f32 %v355, 0.0
    %v378 = vmax.f32 %v360, 0.0
    %v379 = vmax.f32 %v365, 0.0
    %v380 = vmax.f32 %v370, 0.0
    %v381 = vld [vmem:[#allocation8] sm:$0xff]
    %v382 = vld [vmem:[#allocation8 + $0x8] sm:$0xff]
    %v383 = vld [vmem:[#allocation8 + $0x10] sm:$0xff]
    %v384 = vld [vmem:[#allocation8 + $0x18] sm:$0xff]
    %v385 = vld [vmem:[#allocation8 + $0x20] sm:$0xff]
    %v386 = vld [vmem:[#allocation8 + $0x28] sm:$0xff]
    %v387 = vld [vmem:[#allocation8 + $0x30] sm:$0xff]
    %v388 = vld [vmem:[#allocation8 + $0x38] sm:$0xff]
    %v389 = vld [vmem:[#allocation8 + $0x40] sm:$0xff]
    %v390 = vld [vmem:[#allocation8 + $0x48] sm:$0xff]
    %v391 = vld [vmem:[#allocation8 + $0x50] sm:$0xff]
    %v392 = vld [vmem:[#allocation8 + $0x58] sm:$0xff]
    %v393 = vld [vmem:[#allocation8 + $0x60] sm:$0xff]
    %v394 = vld [vmem:[#allocation8 + $0x68] sm:$0xff]
    %v395 = vld [vmem:[#allocation8 + $0x70] sm:$0xff]
    %v396 = vld [vmem:[#allocation8 + $0x78] sm:$0xff]
    %v397 = vld [vmem:[%s6] sm:$0x1]
    %v399 = vlaneseq
    %v400 = vshrl.u32 %v399, 7
    %v401 = vsub.s32 0, %v400
    %v402 = vrot.slane %v397, %v401
    %404 = vmatprep.subr.mxu0 0.0
    %405 = vmatpush1.msra.mxu0 %v396
    %406 = vmatprep.subr.mxu0 0.0
    %407 = vmatpush1.msra.mxu0 %v395
    %408 = vmatprep.subr.mxu0 0.0
    %409 = vmatpush1.msra.mxu0 %v394
    %410 = vmatprep.subr.mxu0 0.0
    %411 = vmatpush1.msra.mxu0 %v393
    %412 = vmatprep.subr.mxu0 0.0
    %413 = vmatpush1.msra.mxu0 %v392
    %414 = vmatprep.subr.mxu0 0.0
    %415 = vmatpush1.msra.mxu0 %v391
    %416 = vmatprep.subr.mxu0 0.0
    %417 = vmatpush1.msra.mxu0 %v390
    %418 = vmatprep.subr.mxu0 0.0
    %419 = vmatpush1.msra.mxu0 %v389
    %420 = vmatprep.subr.mxu0 0.0
    %421 = vmatpush1.msra.mxu0 %v388
    %422 = vmatprep.subr.mxu0 0.0
    %423 = vmatpush1.msra.mxu0 %v387
    %424 = vmatprep.subr.mxu0 0.0
    %425 = vmatpush1.msra.mxu0 %v386
    %426 = vmatprep.subr.mxu0 0.0
    %427 = vmatpush1.msra.mxu0 %v385
    %428 = vmatprep.subr.mxu0 0.0
    %429 = vmatpush1.msra.mxu0 %v384
    %430 = vmatprep.subr.mxu0 0.0
    %431 = vmatpush1.msra.mxu0 %v383
    %432 = vmatprep.subr.mxu0 0.0
    %433 = vmatpush1.msra.mxu0 %v382
    %434 = vmatprep.subr.mxu0 0.0
    %435 = vmatpush1.msra.mxu0 %v381
    %436 = vmatprep.subr.mxu0 0.0
    %437 = vmatpush2.msra.mxu0 0.0
    %438 = vmatprep.subr.mxu0 0.0
    %439 = vmatpush2.msra.mxu0 0.0
    %440 = vmatprep.subr.mxu0 0.0
    %441 = vmatpush2.msra.mxu0 0.0
    %442 = vmatprep.subr.mxu0 0.0
    %443 = vmatpush2.msra.mxu0 0.0
    %444 = vmatprep.subr.mxu0 0.0
    %445 = vmatpush2.msra.mxu0 0.0
    %446 = vmatprep.subr.mxu0 0.0
    %447 = vmatpush2.msra.mxu0 0.0
    %448 = vmatprep.subr.mxu0 0.0
    %449 = vmatpush2.msra.mxu0 0.0
    %450 = vmatprep.subr.mxu0 0.0
    %451 = vmatpush2.msra.mxu0 0.0
    %452 = vmatprep.subr.mxu0 0.0
    %453 = vmatpush2.msra.mxu0 0.0
    %454 = vmatprep.subr.mxu0 0.0
    %455 = vmatpush2.msra.mxu0 0.0
    %456 = vmatprep.subr.mxu0 0.0
    %457 = vmatpush2.msra.mxu0 0.0
    %458 = vmatprep.subr.mxu0 0.0
    %459 = vmatpush2.msra.mxu0 0.0
    %460 = vmatprep.subr.mxu0 0.0
    %461 = vmatpush2.msra.mxu0 0.0
    %462 = vmatprep.subr.mxu0 0.0
    %463 = vmatpush2.msra.mxu0 0.0
    %464 = vmatprep.subr.mxu0 0.0
    %465 = vmatpush2.msra.mxu0 0.0
    %466 = vmatprep.subr.mxu0 0.0
    %467 = vmatpush2.msra.mxu0 0.0
    %468 = vmatprep.mubr.f32.mxu0 0.0
    %469 = vmatmul.mubr.f32.gmra.mxu0 %v373
    %v470 = vpop.f32.mrf.mxu0
    %v471 = vadd.f32 %v402, %v470
    %v472 = vpop.f32.mrf.mxu0
    %473 = vmatprep.mubr.f32.mxu0 0.0
    %474 = vmatmul.mubr.f32.gmra.mxu0 %v374
    %v475 = vpop.f32.mrf.mxu0
    %v476 = vadd.f32 %v402, %v475
    %v477 = vpop.f32.mrf.mxu0
    %478 = vmatprep.mubr.f32.mxu0 0.0
    %479 = vmatmul.mubr.f32.gmra.mxu0 %v375
    %v480 = vpop.f32.mrf.mxu0
    %v481 = vadd.f32 %v402, %v480
    %v482 = vpop.f32.mrf.mxu0
    %483 = vmatprep.mubr.f32.mxu0 0.0
    %484 = vmatmul.mubr.f32.gmra.mxu0 %v376
    %v485 = vpop.f32.mrf.mxu0
    %v486 = vadd.f32 %v402, %v485
    %v487 = vpop.f32.mrf.mxu0
    %488 = vmatprep.mubr.f32.mxu0 0.0
    %489 = vmatmul.mubr.f32.gmra.mxu0 %v377
    %v490 = vpop.f32.mrf.mxu0
    %v491 = vadd.f32 %v402, %v490
    %v492 = vpop.f32.mrf.mxu0
    %493 = vmatprep.mubr.f32.mxu0 0.0
    %494 = vmatmul.mubr.f32.gmra.mxu0 %v378
    %v495 = vpop.f32.mrf.mxu0
    %v496 = vadd.f32 %v402, %v495
    %v497 = vpop.f32.mrf.mxu0
    %498 = vmatprep.mubr.f32.mxu0 0.0
    %499 = vmatmul.mubr.f32.gmra.mxu0 %v379
    %v500 = vpop.f32.mrf.mxu0
    %v501 = vadd.f32 %v402, %v500
    %v502 = vpop.f32.mrf.mxu0
    %503 = vmatprep.mubr.f32.mxu0 0.0
    %504 = vmatmul.mubr.f32.gmra.mxu0 %v380
    %v505 = vpop.f32.mrf.mxu0
    %v506 = vadd.f32 %v402, %v505
    %v507 = vpop.f32.mrf.mxu0
    %508 = vdwg.mxu0
    %v509 = vmax.f32 %v471, 0.0
    %v510 = vmax.f32 %v476, 0.0
    %v511 = vmax.f32 %v481, 0.0
    %v512 = vmax.f32 %v486, 0.0
    %v513 = vmax.f32 %v491, 0.0
    %v514 = vmax.f32 %v496, 0.0
    %v515 = vmax.f32 %v501, 0.0
    %v516 = vmax.f32 %v506, 0.0
    %v517 = vld [vmem:[#allocation10] sm:$0xff]
    %v518 = vld [vmem:[#allocation10 + $0x8] sm:$0xff]
    %v519 = vld [vmem:[#allocation10 + $0x10] sm:$0xff]
    %v520 = vld [vmem:[#allocation10 + $0x18] sm:$0xff]
    %v521 = vld [vmem:[#allocation10 + $0x20] sm:$0xff]
    %v522 = vld [vmem:[#allocation10 + $0x28] sm:$0xff]
    %v523 = vld [vmem:[#allocation10 + $0x30] sm:$0xff]
    %v524 = vld [vmem:[#allocation10 + $0x38] sm:$0xff]
    %v525 = vld [vmem:[#allocation10 + $0x40] sm:$0xff]
    %v526 = vld [vmem:[#allocation10 + $0x48] sm:$0xff]
    %v527 = vld [vmem:[#allocation10 + $0x50] sm:$0xff]
    %v528 = vld [vmem:[#allocation10 + $0x58] sm:$0xff]
    %v529 = vld [vmem:[#allocation10 + $0x60] sm:$0xff]
    %v530 = vld [vmem:[#allocation10 + $0x68] sm:$0xff]
    %v531 = vld [vmem:[#allocation10 + $0x70] sm:$0xff]
    %v532 = vld [vmem:[#allocation10 + $0x78] sm:$0xff]
    %v533 = vld [vmem:[%s8] sm:$0x1]
    %v535 = vlaneseq
    %v536 = vshrl.u32 %v535, 7
    %v537 = vsub.s32 0, %v536
    %v538 = vrot.slane %v533, %v537
    %540 = vmatprep.subr.mxu0 0.0
    %541 = vmatpush1.msra.mxu0 %v532
    %542 = vmatprep.subr.mxu0 0.0
    %543 = vmatpush1.msra.mxu0 %v531
    %544 = vmatprep.subr.mxu0 0.0
    %545 = vmatpush1.msra.mxu0 %v530
    %546 = vmatprep.subr.mxu0 0.0
    %547 = vmatpush1.msra.mxu0 %v529
    %548 = vmatprep.subr.mxu0 0.0
    %549 = vmatpush1.msra.mxu0 %v528
    %550 = vmatprep.subr.mxu0 0.0
    %551 = vmatpush1.msra.mxu0 %v527
    %552 = vmatprep.subr.mxu0 0.0
    %553 = vmatpush1.msra.mxu0 %v526
    %554 = vmatprep.subr.mxu0 0.0
    %555 = vmatpush1.msra.mxu0 %v525
    %556 = vmatprep.subr.mxu0 0.0
    %557 = vmatpush1.msra.mxu0 %v524
    %558 = vmatprep.subr.mxu0 0.0
    %559 = vmatpush1.msra.mxu0 %v523
    %560 = vmatprep.subr.mxu0 0.0
    %561 = vmatpush1.msra.mxu0 %v522
    %562 = vmatprep.subr.mxu0 0.0
    %563 = vmatpush1.msra.mxu0 %v521
    %564 = vmatprep.subr.mxu0 0.0
    %565 = vmatpush1.msra.mxu0 %v520
    %566 = vmatprep.subr.mxu0 0.0
    %567 = vmatpush1.msra.mxu0 %v519
    %568 = vmatprep.subr.mxu0 0.0
    %569 = vmatpush1.msra.mxu0 %v518
    %570 = vmatprep.subr.mxu0 0.0
    %571 = vmatpush1.msra.mxu0 %v517
    %572 = vmatprep.subr.mxu0 0.0
    %573 = vmatpush2.msra.mxu0 0.0
    %574 = vmatprep.subr.mxu0 0.0
    %575 = vmatpush2.msra.mxu0 0.0
    %576 = vmatprep.subr.mxu0 0.0
    %577 = vmatpush2.msra.mxu0 0.0
    %578 = vmatprep.subr.mxu0 0.0
    %579 = vmatpush2.msra.mxu0 0.0
    %580 = vmatprep.subr.mxu0 0.0
    %581 = vmatpush2.msra.mxu0 0.0
    %582 = vmatprep.subr.mxu0 0.0
    %583 = vmatpush2.msra.mxu0 0.0
    %584 = vmatprep.subr.mxu0 0.0
    %585 = vmatpush2.msra.mxu0 0.0
    %586 = vmatprep.subr.mxu0 0.0
    %587 = vmatpush2.msra.mxu0 0.0
    %588 = vmatprep.subr.mxu0 0.0
    %589 = vmatpush2.msra.mxu0 0.0
    %590 = vmatprep.subr.mxu0 0.0
    %591 = vmatpush2.msra.mxu0 0.0
    %592 = vmatprep.subr.mxu0 0.0
    %593 = vmatpush2.msra.mxu0 0.0
    %594 = vmatprep.subr.mxu0 0.0
    %595 = vmatpush2.msra.mxu0 0.0
    %596 = vmatprep.subr.mxu0 0.0
    %597 = vmatpush2.msra.mxu0 0.0
    %598 = vmatprep.subr.mxu0 0.0
    %599 = vmatpush2.msra.mxu0 0.0
    %600 = vmatprep.subr.mxu0 0.0
    %601 = vmatpush2.msra.mxu0 0.0
    %602 = vmatprep.subr.mxu0 0.0
    %603 = vmatpush2.msra.mxu0 0.0
    %604 = vmatprep.mubr.f32.mxu0 0.0
    %605 = vmatmul.mubr.f32.gmra.mxu0 %v509
    %v606 = vpop.f32.mrf.mxu0
    %v607 = vadd.f32 %v538, %v606
    %v608 = vpop.f32.mrf.mxu0
    %609 = vmatprep.mubr.f32.mxu0 0.0
    %610 = vmatmul.mubr.f32.gmra.mxu0 %v510
    %v611 = vpop.f32.mrf.mxu0
    %v612 = vadd.f32 %v538, %v611
    %v613 = vpop.f32.mrf.mxu0
    %614 = vmatprep.mubr.f32.mxu0 0.0
    %615 = vmatmul.mubr.f32.gmra.mxu0 %v511
    %v616 = vpop.f32.mrf.mxu0
    %v617 = vadd.f32 %v538, %v616
    %v618 = vpop.f32.mrf.mxu0
    %619 = vmatprep.mubr.f32.mxu0 0.0
    %620 = vmatmul.mubr.f32.gmra.mxu0 %v512
    %v621 = vpop.f32.mrf.mxu0
    %v622 = vadd.f32 %v538, %v621
    %v623 = vpop.f32.mrf.mxu0
    %624 = vmatprep.mubr.f32.mxu0 0.0
    %625 = vmatmul.mubr.f32.gmra.mxu0 %v513
    %v626 = vpop.f32.mrf.mxu0
    %v627 = vadd.f32 %v538, %v626
    %v628 = vpop.f32.mrf.mxu0
    %629 = vmatprep.mubr.f32.mxu0 0.0
    %630 = vmatmul.mubr.f32.gmra.mxu0 %v514
    %v631 = vpop.f32.mrf.mxu0
    %v632 = vadd.f32 %v538, %v631
    %v633 = vpop.f32.mrf.mxu0
    %634 = vmatprep.mubr.f32.mxu0 0.0
    %635 = vmatmul.mubr.f32.gmra.mxu0 %v515
    %v636 = vpop.f32.mrf.mxu0
    %v637 = vadd.f32 %v538, %v636
    %v638 = vpop.f32.mrf.mxu0
    %639 = vmatprep.mubr.f32.mxu0 0.0
    %640 = vmatmul.mubr.f32.gmra.mxu0 %v516
    %v641 = vpop.f32.mrf.mxu0
    %v642 = vadd.f32 %v538, %v641
    %v643 = vpop.f32.mrf.mxu0
    %644 = vdwg.mxu0
    %645 = vst [vmem:[#allocation11] sm:$0xff] %v607
    %646 = vst [vmem:[#allocation11 + $0x8] sm:$0xff] %v612
    %647 = vst [vmem:[#allocation11 + $0x10] sm:$0xff] %v617
    %648 = vst [vmem:[#allocation11 + $0x18] sm:$0xff] %v622
    %649 = vst [vmem:[#allocation11 + $0x20] sm:$0xff] %v627
    %650 = vst [vmem:[#allocation11 + $0x28] sm:$0xff] %v632
    %651 = vst [vmem:[#allocation11 + $0x30] sm:$0xff] %v637
    %652 = vst [vmem:[#allocation11 + $0x38] sm:$0xff] %v642
    // Predicated region
    $region58: #{tpu_custom_call.1} parent=1 // pred_check
      _
    $region59: #{tpu_custom_call.1} parent=1 // pred_check_branch
      %654 = sbr.rel (0) target = $region61
    $region60: #{tpu_custom_call.1} parent=1 // pred_region
      %s656 = ssub.s32 1024, 1024
      %657 = vsyncadd [#allocation4], %s656
      %s658 = sshll.u32 [#allocation11], 4
      %s659 = int_to_ptr.vmem [resolvable:$true] %s658
      %664 = dma.vmem_to_hbm [thread:$0]  %s659, 1024, %s9, [#allocation4], 128, 128, 8
    $region61: #{tpu_custom_call.1} parent=1 // pred_fallthru
      _
    // Predicated region
    $region62: #{tpu_custom_call.1} parent=1 // pred_check
      _
    $region63: #{tpu_custom_call.1} parent=1 // pred_check_branch
      %666 = sbr.rel (0) target = $region65
    $region64: #{tpu_custom_call.1} parent=1 // pred_region
      %667 = dma.done [#allocation4], 1024
    $region65: #{tpu_custom_call.1} parent=1 // pred_fallthru
      _
    %668 = vsyncpa [#allocation3], 1
    %669 = vsyncpa [#allocation6], 1
    %670 = vsyncpa [#allocation9], 1
    %671 = vsyncpa [#allocation4], 1

</llo_original>
